<compile_context>
chip_gen: v5e
topology: v5e:2x2
jax: 0.10.0
libtpu: 0.0.40
codegen_flags: <defaults>
</compile_context>

<pallas_src>
import functools

import jax
import jax.numpy as jnp
from jax.experimental import pallas as pl
from jax.experimental.pallas import tpu as pltpu

LANE = 128


def _mlp_kernel(x_ref, w1_ref, b1_ref, w2_ref, b2_ref, w3_ref, b3_ref, o_ref):
    # fc1 (bf16 operands -> f32 accumulation on MXU), bias + ReLU in f32 on VPU
    h1 = jnp.dot(x_ref[...], w1_ref[...], preferred_element_type=jnp.float32)
    h1 = jnp.maximum(h1 + b1_ref[...], 0.0)
    # fc2
    h2 = jnp.dot(h1.astype(w2_ref.dtype), w2_ref[...], preferred_element_type=jnp.float32)
    h2 = jnp.maximum(h2 + b2_ref[...], 0.0)
    # Dropout(p=0.3): inference semantics -> identity (no masking/scaling at eval time).
    # TODO(synk): training-mode dropout (random mask + 1/(1-p) scale) not emitted; this
    #             kernel reproduces model.eval() forward semantics.
    # fc3 (output dim is lane-padded to a multiple of 128 by the wrapper)
    out = jnp.dot(h2.astype(w3_ref.dtype), w3_ref[...], preferred_element_type=jnp.float32)
    o_ref[...] = (out + b3_ref[...]).astype(o_ref.dtype)


@functools.partial(jax.jit, static_argnames=("block_b",))
def stock_predictor_forward(x, params, block_b=128):
    """x: (B, input_size) float32. params: dict of transposed (in, out) weights + (1, out) biases."""
    # bf16 MXU operands; biases stay f32 so the epilogue / accumulation stays f32.
    w1 = params["w1"].astype(jnp.bfloat16)
    w2 = params["w2"].astype(jnp.bfloat16)
    w3 = params["w3"].astype(jnp.bfloat16)
    b1 = params["b1"].astype(jnp.float32)
    b2 = params["b2"].astype(jnp.float32)
    b3 = params["b3"].astype(jnp.float32)

    B, F_in = x.shape
    F_out = w3.shape[1]
    H1 = w1.shape[1]
    H2 = w2.shape[1]

    # Lane-dense output: pad fc3's output dim to a multiple of 128 so the out tile
    # stores are unmasked full-lane vst (F_out=8 would be 94% masked waste).
    F_out_p = pl.cdiv(F_out, LANE) * LANE
    if F_out_p != F_out:
        w3 = jnp.pad(w3, ((0, 0), (0, F_out_p - F_out)))
        b3 = jnp.pad(b3, ((0, 0), (0, F_out_p - F_out)))

    # Ragged batch: pad to a multiple of block_b instead of forcing tiny tiles.
    n_blocks = pl.cdiv(B, block_b)
    B_p = n_blocks * block_b
    x_p = x.astype(jnp.bfloat16)
    if B_p != B:
        x_p = jnp.pad(x_p, ((0, B_p - B), (0, 0)))

    flops = 2 * B_p * (F_in * H1 + H1 * H2 + H2 * F_out_p)
    bytes_accessed = (
        x_p.size * 2
        + (w1.size + w2.size + w3.size) * 2
        + (b1.size + b2.size + b3.size) * 4
        + B_p * F_out_p * 4
    )

    out = pl.pallas_call(
        _mlp_kernel,
        out_shape=jax.ShapeDtypeStruct((B_p, F_out_p), jnp.float32),
        grid_spec=pltpu.PrefetchScalarGridSpec(
            num_scalar_prefetch=0,
            grid=(n_blocks,),
            in_specs=[
                # x: tile over batch (128 rows feeds the MXU M dimension properly)
                pl.BlockSpec((block_b, F_in), lambda i: (i, 0)),
                # weights / biases: same full block for every grid step (never re-fetched)
                pl.BlockSpec(w1.shape, lambda i: (0, 0)),
                pl.BlockSpec(b1.shape, lambda i: (0, 0)),
                pl.BlockSpec(w2.shape, lambda i: (0, 0)),
                pl.BlockSpec(b2.shape, lambda i: (0, 0)),
                pl.BlockSpec(w3.shape, lambda i: (0, 0)),
                pl.BlockSpec(b3.shape, lambda i: (0, 0)),
            ],
            out_specs=pl.BlockSpec((block_b, F_out_p), lambda i: (i, 0)),
        ),
        compiler_params=pltpu.CompilerParams(
            dimension_semantics=("parallel",),  # batch axis shards across TCs on v7x
        ),
        cost_estimate=pl.CostEstimate(
            flops=flops, transcendentals=0, bytes_accessed=bytes_accessed
        ),
    )(x_p, w1, b1, w2, b2, w3, b3)

    return out[:B, :F_out]


def init_params(key, input_size, output_size):
    """Deterministic init. Mirrors nn.Linear shapes; weights stored transposed (in, out)."""
    k1, k2, k3, k4, k5, k6 = jax.random.split(key, 6)

    def uniform(k, shape, fan_in):
        bound = 1.0 / jnp.sqrt(fan_in)
        return jax.random.uniform(k, shape, jnp.float32, -bound, bound)

    # nn.Linear(input_size, 512): weight (512, input_size) -> transposed (input_size, 512)
    w1 = uniform(k1, (input_size, 512), input_size)
    b1 = uniform(k2, (1, 512), input_size)
    w2 = uniform(k3, (512, 256), 512)
    b2 = uniform(k4, (1, 256), 512)
    w3 = uniform(k5, (256, output_size), 256)
    b3 = uniform(k6, (1, output_size), 256)
    return {"w1": w1, "b1": b1, "w2": w2, "b2": b2, "w3": w3, "b3": b3}


def reference_forward(x, params):
    """Pure-JAX reference with the same bf16-operand / f32-accumulation numerics."""
    def mm(a, w):
        return jnp.dot(a.astype(jnp.bfloat16), w.astype(jnp.bfloat16),
                       preferred_element_type=jnp.float32)

    h1 = jnp.maximum(mm(x, params["w1"]) + params["b1"], 0.0)
    h2 = jnp.maximum(mm(h1, params["w2"]) + params["b2"], 0.0)
    return mm(h2, params["w3"]) + params["b3"]


if __name__ == "__main__":
    input_size = 32
    output_size = 8
    batch = 16  # not a multiple of block_b -> exercises the cdiv/padding path

    key = jax.random.PRNGKey(0)
    kx, kp = jax.random.split(key)
    x = jax.random.normal(kx, (batch, input_size), dtype=jnp.float32)
    params = init_params(kp, input_size, output_size)

    out = stock_predictor_forward(x, params)
    out = jax.block_until_ready(out)

    ref = reference_forward(x, params)
    assert out.shape == (batch, output_size)
    assert jnp.allclose(out, ref, atol=1e-2, rtol=1e-2), float(jnp.max(jnp.abs(out - ref)))

    print("KERNEL_OK")
</pallas_src>

<mosaic_0001>
module attributes {stable_mosaic.version = 11 : i64} {
  func.func @_mlp_kernel(%arg0: i32, %arg1: memref<128x32xbf16, #tpu.memory_space<vmem>>, %arg2: memref<32x512xbf16, #tpu.memory_space<vmem>>, %arg3: memref<1x512xf32, #tpu.memory_space<vmem>>, %arg4: memref<512x256xbf16, #tpu.memory_space<vmem>>, %arg5: memref<1x256xf32, #tpu.memory_space<vmem>>, %arg6: memref<256x128xbf16, #tpu.memory_space<vmem>>, %arg7: memref<1x128xf32, #tpu.memory_space<vmem>>, %arg8: memref<128x128xf32, #tpu.memory_space<vmem>>) attributes {dimension_semantics = [#tpu.dimension_semantics<parallel>], iteration_bounds = array<i64: 1>, scalar_prefetch = 0 : i64, scratch_operands = 0 : i64, tpu.core_type = #tpu.core_type<tc>, window_params = [{transform_indices = @transform_0, window_bounds = array<i64: 128, 32>}, {pipeline_mode = #tpu.pipeline_mode<synchronous>, transform_indices = @transform_1, window_bounds = array<i64: 32, 512>}, {pipeline_mode = #tpu.pipeline_mode<synchronous>, transform_indices = @transform_2, window_bounds = array<i64: 1, 512>}, {pipeline_mode = #tpu.pipeline_mode<synchronous>, transform_indices = @transform_3, window_bounds = array<i64: 512, 256>}, {pipeline_mode = #tpu.pipeline_mode<synchronous>, transform_indices = @transform_4, window_bounds = array<i64: 1, 256>}, {pipeline_mode = #tpu.pipeline_mode<synchronous>, transform_indices = @transform_5, window_bounds = array<i64: 256, 128>}, {pipeline_mode = #tpu.pipeline_mode<synchronous>, transform_indices = @transform_6, window_bounds = array<i64: 1, 128>}, {transform_indices = @transform_7, window_bounds = array<i64: 128, 128>}]} {
    %c0 = arith.constant 0 : index
    %c0_0 = arith.constant 0 : index
    %0 = vector.load %arg1[%c0, %c0_0] : memref<128x32xbf16, #tpu.memory_space<vmem>>, vector<128x32xbf16>
    %c0_1 = arith.constant 0 : index
    %c0_2 = arith.constant 0 : index
    %1 = vector.load %arg2[%c0_1, %c0_2] : memref<32x512xbf16, #tpu.memory_space<vmem>>, vector<32x512xbf16>
    %cst = arith.constant dense<0.000000e+00> : vector<128x512xf32>
    %2 = tpu.matmul %0, %1, %cst {dimension_numbers = #tpu.dot_dimension_numbers<[1], [0], [0], [1], [0, 0, 1, 1], [], []>} : vector<128x32xbf16>, vector<32x512xbf16>, vector<128x512xf32> -> vector<128x512xf32>
    %c0_3 = arith.constant 0 : index
    %c0_4 = arith.constant 0 : index
    %3 = vector.load %arg3[%c0_3, %c0_4] : memref<1x512xf32, #tpu.memory_space<vmem>>, vector<1x512xf32>
    %4 = vector.broadcast %3 : vector<1x512xf32> to vector<128x512xf32>
    %5 = arith.addf %2, %4 : vector<128x512xf32>
    %cst_5 = arith.constant 0.000000e+00 : f32
    %6 = vector.broadcast %cst_5 : f32 to vector<128x512xf32>
    %7 = arith.maximumf %5, %6 : vector<128x512xf32>
    %8 = arith.truncf %7 : vector<128x512xf32> to vector<128x512xbf16>
    %c0_6 = arith.constant 0 : index
    %c0_7 = arith.constant 0 : index
    %9 = vector.load %arg4[%c0_6, %c0_7] : memref<512x256xbf16, #tpu.memory_space<vmem>>, vector<512x256xbf16>
    %cst_8 = arith.constant dense<0.000000e+00> : vector<128x256xf32>
    %10 = tpu.matmul %8, %9, %cst_8 {dimension_numbers = #tpu.dot_dimension_numbers<[1], [0], [0], [1], [0, 0, 1, 1], [], []>} : vector<128x512xbf16>, vector<512x256xbf16>, vector<128x256xf32> -> vector<128x256xf32>
    %c0_9 = arith.constant 0 : index
    %c0_10 = arith.constant 0 : index
    %11 = vector.load %arg5[%c0_9, %c0_10] : memref<1x256xf32, #tpu.memory_space<vmem>>, vector<1x256xf32>
    %12 = vector.broadcast %11 : vector<1x256xf32> to vector<128x256xf32>
    %13 = arith.addf %10, %12 : vector<128x256xf32>
    %cst_11 = arith.constant 0.000000e+00 : f32
    %14 = vector.broadcast %cst_11 : f32 to vector<128x256xf32>
    %15 = arith.maximumf %13, %14 : vector<128x256xf32>
    %16 = arith.truncf %15 : vector<128x256xf32> to vector<128x256xbf16>
    %c0_12 = arith.constant 0 : index
    %c0_13 = arith.constant 0 : index
    %17 = vector.load %arg6[%c0_12, %c0_13] : memref<256x128xbf16, #tpu.memory_space<vmem>>, vector<256x128xbf16>
    %cst_14 = arith.constant dense<0.000000e+00> : vector<128x128xf32>
    %18 = tpu.matmul %16, %17, %cst_14 {dimension_numbers = #tpu.dot_dimension_numbers<[1], [0], [0], [1], [0, 0, 1, 1], [], []>} : vector<128x256xbf16>, vector<256x128xbf16>, vector<128x128xf32> -> vector<128x128xf32>
    %c0_15 = arith.constant 0 : index
    %c0_16 = arith.constant 0 : index
    %19 = vector.load %arg7[%c0_15, %c0_16] : memref<1x128xf32, #tpu.memory_space<vmem>>, vector<1x128xf32>
    %20 = vector.broadcast %19 : vector<1x128xf32> to vector<128x128xf32>
    %21 = arith.addf %18, %20 : vector<128x128xf32>
    %c0_17 = arith.constant 0 : index
    %c0_18 = arith.constant 0 : index
    %22 = vector.load %arg8[%c0_17, %c0_18] : memref<128x128xf32, #tpu.memory_space<vmem>>, vector<128x128xf32>
    tpu.vector_store %arg8[%c0_17, %c0_18], %21 {strides = array<i32>} : memref<128x128xf32, #tpu.memory_space<vmem>>, vector<128x128xf32>,
    return
  }
  func.func @transform_0(%arg0: i32) -> (i32, i32) {
    %c0_i32 = arith.constant 0 : i32
    %c0_i32_0 = arith.constant 0 : i32
    return %arg0, %c0_i32 : i32, i32
  }
  func.func @transform_1(%arg0: i32) -> (i32, i32) {
    %c0_i32 = arith.constant 0 : i32
    %c0_i32_0 = arith.constant 0 : i32
    %c0_i32_1 = arith.constant 0 : i32
    return %c0_i32, %c0_i32_0 : i32, i32
  }
  func.func @transform_2(%arg0: i32) -> (i32, i32) {
    %c0_i32 = arith.constant 0 : i32
    %c0_i32_0 = arith.constant 0 : i32
    %c0_i32_1 = arith.constant 0 : i32
    return %c0_i32, %c0_i32_0 : i32, i32
  }
  func.func @transform_3(%arg0: i32) -> (i32, i32) {
    %c0_i32 = arith.constant 0 : i32
    %c0_i32_0 = arith.constant 0 : i32
    %c0_i32_1 = arith.constant 0 : i32
    return %c0_i32, %c0_i32_0 : i32, i32
  }
  func.func @transform_4(%arg0: i32) -> (i32, i32) {
    %c0_i32 = arith.constant 0 : i32
    %c0_i32_0 = arith.constant 0 : i32
    %c0_i32_1 = arith.constant 0 : i32
    return %c0_i32, %c0_i32_0 : i32, i32
  }
  func.func @transform_5(%arg0: i32) -> (i32, i32) {
    %c0_i32 = arith.constant 0 : i32
    %c0_i32_0 = arith.constant 0 : i32
    %c0_i32_1 = arith.constant 0 : i32
    return %c0_i32, %c0_i32_0 : i32, i32
  }
  func.func @transform_6(%arg0: i32) -> (i32, i32) {
    %c0_i32 = arith.constant 0 : i32
    %c0_i32_0 = arith.constant 0 : i32
    %c0_i32_1 = arith.constant 0 : i32
    return %c0_i32, %c0_i32_0 : i32, i32
  }
  func.func @transform_7(%arg0: i32) -> (i32, i32) {
    %c0_i32 = arith.constant 0 : i32
    %c0_i32_0 = arith.constant 0 : i32
    return %arg0, %c0_i32 : i32, i32
  }
}

</mosaic_0001>

<llo_original>
// kernel: stock_predictor_forward.1
$region0: #{stock_predictor_forward.1}
  #allocation0 [shape = 'u32[]', space=smem, size = 0x4, offset = 0x4, fixed_abs, tag = 'smem constant byte address 0x4 - core index']
  #allocation1 [shape = 'u32[72,128]{1,0:T(1,128)}', space=vmem, size = 0x9000, scoped, tag = 'internal scratch']
  %s0 = inlined_call_operand.vmem [shape: bf16[128,32], index: 0, kind: input, shape index: {}]
  %s1 = inlined_call_operand.vmem [shape: bf16[32,512], index: 1, kind: input, shape index: {}]
  %s2 = inlined_call_operand.vmem [shape: f32[1,512], index: 2, kind: input, shape index: {}]
  %s3 = inlined_call_operand.vmem [shape: bf16[512,256], index: 3, kind: input, shape index: {}]
  %s4 = inlined_call_operand.vmem [shape: f32[1,256], index: 4, kind: input, shape index: {}]
  %s5 = inlined_call_operand.vmem [shape: bf16[256,128], index: 5, kind: input, shape index: {}]
  %s6 = inlined_call_operand.vmem [shape: f32[1,128], index: 6, kind: input, shape index: {}]
  %s7 = inlined_call_operand.vmem [shape: f32[128,128], index: 7, kind: output, shape index: {}]
  %s8 = sld [smem:[#allocation0]]
  $region38: #{stock_predictor_forward.1} parent=0
    _
  %s10 = ssub.s32 1, %s8
  %s11 = scalar_select 0, %s10, %s8
  // Predicated region
  $region2: #{stock_predictor_forward.1} parent=0 // pred_check
    _
  $region3: #{stock_predictor_forward.1} parent=0 // pred_check_branch
    %13 = sbr.rel (0) target = $region5
  $region4: #{stock_predictor_forward.1} parent=0 // pred_region
    _
  $region5: #{stock_predictor_forward.1} parent=0 // pred_fallthru
    _
  // Predicated region
  $region6: #{stock_predictor_forward.1} parent=0 // pred_check
    _
  $region7: #{stock_predictor_forward.1} parent=0 // pred_check_branch
    %15 = sbr.rel (0) target = $region9
  $region8: #{stock_predictor_forward.1} parent=0 // pred_region
    _
  $region9: #{stock_predictor_forward.1} parent=0 // pred_fallthru
    _
  // Predicated region
  $region10: #{stock_predictor_forward.1} parent=0 // pred_check
    _
  $region11: #{stock_predictor_forward.1} parent=0 // pred_check_branch
    %17 = sbr.rel (0) target = $region13
  $region12: #{stock_predictor_forward.1} parent=0 // pred_region
    _
  $region13: #{stock_predictor_forward.1} parent=0 // pred_fallthru
    _
  // Predicated region
  $region14: #{stock_predictor_forward.1} parent=0 // pred_check
    _
  $region15: #{stock_predictor_forward.1} parent=0 // pred_check_branch
    %19 = sbr.rel (0) target = $region17
  $region16: #{stock_predictor_forward.1} parent=0 // pred_region
    _
  $region17: #{stock_predictor_forward.1} parent=0 // pred_fallthru
    _
  // Predicated region
  $region18: #{stock_predictor_forward.1} parent=0 // pred_check
    _
  $region19: #{stock_predictor_forward.1} parent=0 // pred_check_branch
    %21 = sbr.rel (0) target = $region21
  $region20: #{stock_predictor_forward.1} parent=0 // pred_region
    _
  $region21: #{stock_predictor_forward.1} parent=0 // pred_fallthru
    _
  // Predicated region
  $region22: #{stock_predictor_forward.1} parent=0 // pred_check
    _
  $region23: #{stock_predictor_forward.1} parent=0 // pred_check_branch
    %23 = sbr.rel (0) target = $region25
  $region24: #{stock_predictor_forward.1} parent=0 // pred_region
    _
  $region25: #{stock_predictor_forward.1} parent=0 // pred_fallthru
    _
  // Predicated region
  $region26: #{stock_predictor_forward.1} parent=0 // pred_check
    _
  $region27: #{stock_predictor_forward.1} parent=0 // pred_check_branch
    %25 = sbr.rel (0) target = $region29
  $region28: #{stock_predictor_forward.1} parent=0 // pred_region
    _
  $region29: #{stock_predictor_forward.1} parent=0 // pred_fallthru
    _
  %v27 = vld [vmem:[%s0] sm:$0xf]
  %v28 = vld [vmem:[%s0 + $0x4] sm:$0xf]
  %v29 = vld [vmem:[%s0 + $0x8] sm:$0xf]
  %v30 = vld [vmem:[%s0 + $0xc] sm:$0xf]
  %v31 = vld [vmem:[%s0 + $0x10] sm:$0xf]
  %v32 = vld [vmem:[%s0 + $0x14] sm:$0xf]
  %v33 = vld [vmem:[%s0 + $0x18] sm:$0xf]
  %v34 = vld [vmem:[%s0 + $0x1c] sm:$0xf]
  %v35 = vld [vmem:[%s0 + $0x20] sm:$0xf]
  %v36 = vld [vmem:[%s0 + $0x24] sm:$0xf]
  %v37 = vld [vmem:[%s0 + $0x28] sm:$0xf]
  %v38 = vld [vmem:[%s0 + $0x2c] sm:$0xf]
  %v39 = vld [vmem:[%s0 + $0x30] sm:$0xf]
  %v40 = vld [vmem:[%s0 + $0x34] sm:$0xf]
  %v41 = vld [vmem:[%s0 + $0x38] sm:$0xf]
  %v42 = vld [vmem:[%s0 + $0x3c] sm:$0xf]
  %v43 = vld [vmem:[%s1] sm:$0xff]
  %v44 = vld [vmem:[%s1 + $0x8] sm:$0xff]
  %v45 = vld [vmem:[%s1 + $0x10] sm:$0xff]
  %v46 = vld [vmem:[%s1 + $0x18] sm:$0xff]
  %v47 = vld [vmem:[%s1 + $0x20] sm:$0xff]
  %v48 = vld [vmem:[%s1 + $0x28] sm:$0xff]
  %v49 = vld [vmem:[%s1 + $0x30] sm:$0xff]
  %v50 = vld [vmem:[%s1 + $0x38] sm:$0xff]
  %v51 = vld [vmem:[%s2] sm:$0xf]
  %v53 = vperm.slane %v51, 0
  %v54 = vperm.slane %v51, 1
  %v55 = vperm.slane %v51, 2
  %v56 = vperm.slane %v51, 3
  %v77 = vunpack.c.l.b16 %v27
  %v78 = vunpack.c.l.b16 %v28
  %v79 = vunpack.c.l.b16 %v29
  %v80 = vunpack.c.l.b16 %v30
  %v81 = vunpack.c.l.b16 %v31
  %v82 = vunpack.c.l.b16 %v32
  %v83 = vunpack.c.l.b16 %v33
  %v84 = vunpack.c.l.b16 %v34
  %v85 = vunpack.c.l.b16 %v35
  %v86 = vunpack.c.l.b16 %v36
  %v87 = vunpack.c.l.b16 %v37
  %v88 = vunpack.c.l.b16 %v38
  %v89 = vunpack.c.l.b16 %v39
  %v90 = vunpack.c.l.b16 %v40
  %v91 = vunpack.c.l.b16 %v41
  %v92 = vunpack.c.l.b16 %v42
  %v93 = vpack.c.b16 %v78, %v77
  %v94 = vpack.c.b16 %v80, %v79
  %v95 = vpack.c.b16 %v82, %v81
  %v96 = vpack.c.b16 %v84, %v83
  %v97 = vpack.c.b16 %v86, %v85
  %v98 = vpack.c.b16 %v88, %v87
  %v99 = vpack.c.b16 %v90, %v89
  %v100 = vpack.c.b16 %v92, %v91
  %v109 = vunpack.c.l.b16 %v43
  %v110 = vunpack.c.h.b16 %v43
  %v111 = vunpack.c.l.b16 %v44
  %v112 = vunpack.c.h.b16 %v44
  %v113 = vunpack.c.l.b16 %v45
  %v114 = vunpack.c.h.b16 %v45
  %v115 = vunpack.c.l.b16 %v46
  %v116 = vunpack.c.h.b16 %v46
  %v117 = vunpack.c.l.b16 %v47
  %v118 = vunpack.c.h.b16 %v47
  %v119 = vunpack.c.l.b16 %v48
  %v120 = vunpack.c.h.b16 %v48
  %v121 = vunpack.c.l.b16 %v49
  %v122 = vunpack.c.h.b16 %v49
  %v123 = vunpack.c.l.b16 %v50
  %v124 = vunpack.c.h.b16 %v50
  %v125 = vpack.c.b16 %v113, %v109
  %v126 = vpack.c.b16 %v114, %v110
  %v127 = vpack.c.b16 %v115, %v111
  %v128 = vpack.c.b16 %v116, %v112
  %v129 = vpack.c.b16 %v121, %v117
  %v130 = vpack.c.b16 %v122, %v118
  %v131 = vpack.c.b16 %v123, %v119
  %v132 = vpack.c.b16 %v124, %v120
  %vm141 = vcmask 261120
  %v143 = vsel %vm141, %v93, 0
  %v146 = vsel %vm141, %v94, 0
  %v149 = vsel %vm141, %v95, 0
  %v152 = vsel %vm141, %v96, 0
  %v155 = vsel %vm141, %v97, 0
  %v158 = vsel %vm141, %v98, 0
  %v161 = vsel %vm141, %v99, 0
  %v164 = vsel %vm141, %v100, 0
  %166 = vmatpush.bf16.msra.mxu0 0
  %167 = vmatpush.bf16.msra.mxu0 0
  %168 = vmatpush.bf16.msra.mxu0 0
  %169 = vmatpush.bf16.msra.mxu0 0
  %170 = vmatpush.bf16.msra.mxu0 0
  %171 = vmatpush.bf16.msra.mxu0 0
  %172 = vmatpush.bf16.msra.mxu0 %v129
  %173 = vmatpush.bf16.msra.mxu0 %v125
  %174 = vmatmul.bf16.gmra.mxu0 %v143
  %v175 = vpop.f32.mrf.mxu0
  %v176 = vadd.f32 %v53, %v175
  %v177 = vpop.f32.mrf.mxu0
  %v178 = vadd.f32 %v53, %v177
  %179 = vmatmul.bf16.gmra.mxu0 %v146
  %v180 = vpop.f32.mrf.mxu0
  %v181 = vadd.f32 %v53, %v180
  %v182 = vpop.f32.mrf.mxu0
  %v183 = vadd.f32 %v53, %v182
  %184 = vmatmul.bf16.gmra.mxu0 %v149
  %v185 = vpop.f32.mrf.mxu0
  %v186 = vadd.f32 %v53, %v185
  %v187 = vpop.f32.mrf.mxu0
  %v188 = vadd.f32 %v53, %v187
  %189 = vmatmul.bf16.gmra.mxu0 %v152
  %v190 = vpop.f32.mrf.mxu0
  %v191 = vadd.f32 %v53, %v190
  %v192 = vpop.f32.mrf.mxu0
  %v193 = vadd.f32 %v53, %v192
  %194 = vmatmul.bf16.gmra.mxu0 %v155
  %v195 = vpop.f32.mrf.mxu0
  %v196 = vadd.f32 %v53, %v195
  %v197 = vpop.f32.mrf.mxu0
  %v198 = vadd.f32 %v53, %v197
  %199 = vmatmul.bf16.gmra.mxu0 %v158
  %v200 = vpop.f32.mrf.mxu0
  %v201 = vadd.f32 %v53, %v200
  %v202 = vpop.f32.mrf.mxu0
  %v203 = vadd.f32 %v53, %v202
  %204 = vmatmul.bf16.gmra.mxu0 %v161
  %v205 = vpop.f32.mrf.mxu0
  %v206 = vadd.f32 %v53, %v205
  %v207 = vpop.f32.mrf.mxu0
  %v208 = vadd.f32 %v53, %v207
  %209 = vmatmul.bf16.gmra.mxu0 %v164
  %v210 = vpop.f32.mrf.mxu0
  %v211 = vadd.f32 %v53, %v210
  %v212 = vpop.f32.mrf.mxu0
  %v213 = vadd.f32 %v53, %v212
  %214 = vdwg.mxu0
  %215 = vmatpush.bf16.msra.mxu0 0
  %216 = vmatpush.bf16.msra.mxu0 0
  %217 = vmatpush.bf16.msra.mxu0 0
  %218 = vmatpush.bf16.msra.mxu0 0
  %219 = vmatpush.bf16.msra.mxu0 0
  %220 = vmatpush.bf16.msra.mxu0 0
  %221 = vmatpush.bf16.msra.mxu0 %v130
  %222 = vmatpush.bf16.msra.mxu0 %v126
  %223 = vmatmul.bf16.gmra.mxu0 %v143
  %v224 = vpop.f32.mrf.mxu0
  %v225 = vadd.f32 %v54, %v224
  %v226 = vpop.f32.mrf.mxu0
  %v227 = vadd.f32 %v54, %v226
  %228 = vmatmul.bf16.gmra.mxu0 %v146
  %v229 = vpop.f32.mrf.mxu0
  %v230 = vadd.f32 %v54, %v229
  %v231 = vpop.f32.mrf.mxu0
  %v232 = vadd.f32 %v54, %v231
  %233 = vmatmul.bf16.gmra.mxu0 %v149
  %v234 = vpop.f32.mrf.mxu0
  %v235 = vadd.f32 %v54, %v234
  %v236 = vpop.f32.mrf.mxu0
  %v237 = vadd.f32 %v54, %v236
  %238 = vmatmul.bf16.gmra.mxu0 %v152
  %v239 = vpop.f32.mrf.mxu0
  %v240 = vadd.f32 %v54, %v239
  %v241 = vpop.f32.mrf.mxu0
  %v242 = vadd.f32 %v54, %v241
  %243 = vmatmul.bf16.gmra.mxu0 %v155
  %v244 = vpop.f32.mrf.mxu0
  %v245 = vadd.f32 %v54, %v244
  %v246 = vpop.f32.mrf.mxu0
  %v247 = vadd.f32 %v54, %v246
  %248 = vmatmul.bf16.gmra.mxu0 %v158
  %v249 = vpop.f32.mrf.mxu0
  %v250 = vadd.f32 %v54, %v249
  %v251 = vpop.f32.mrf.mxu0
  %v252 = vadd.f32 %v54, %v251
  %253 = vmatmul.bf16.gmra.mxu0 %v161
  %v254 = vpop.f32.mrf.mxu0
  %v255 = vadd.f32 %v54, %v254
  %v256 = vpop.f32.mrf.mxu0
  %v257 = vadd.f32 %v54, %v256
  %258 = vmatmul.bf16.gmra.mxu0 %v164
  %v259 = vpop.f32.mrf.mxu0
  %v260 = vadd.f32 %v54, %v259
  %v261 = vpop.f32.mrf.mxu0
  %v262 = vadd.f32 %v54, %v261
  %263 = vdwg.mxu0
  %264 = vmatpush.bf16.msra.mxu0 0
  %265 = vmatpush.bf16.msra.mxu0 0
  %266 = vmatpush.bf16.msra.mxu0 0
  %267 = vmatpush.bf16.msra.mxu0 0
  %268 = vmatpush.bf16.msra.mxu0 0
  %269 = vmatpush.bf16.msra.mxu0 0
  %270 = vmatpush.bf16.msra.mxu0 %v131
  %271 = vmatpush.bf16.msra.mxu0 %v127
  %272 = vmatmul.bf16.gmra.mxu0 %v143
  %v273 = vpop.f32.mrf.mxu0
  %v274 = vadd.f32 %v55, %v273
  %v275 = vpop.f32.mrf.mxu0
  %v276 = vadd.f32 %v55, %v275
  %277 = vmatmul.bf16.gmra.mxu0 %v146
  %v278 = vpop.f32.mrf.mxu0
  %v279 = vadd.f32 %v55, %v278
  %v280 = vpop.f32.mrf.mxu0
  %v281 = vadd.f32 %v55, %v280
  %282 = vmatmul.bf16.gmra.mxu0 %v149
  %v283 = vpop.f32.mrf.mxu0
  %v284 = vadd.f32 %v55, %v283
  %v285 = vpop.f32.mrf.mxu0
  %v286 = vadd.f32 %v55, %v285
  %287 = vmatmul.bf16.gmra.mxu0 %v152
  %v288 = vpop.f32.mrf.mxu0
  %v289 = vadd.f32 %v55, %v288
  %v290 = vpop.f32.mrf.mxu0
  %v291 = vadd.f32 %v55, %v290
  %292 = vmatmul.bf16.gmra.mxu0 %v155
  %v293 = vpop.f32.mrf.mxu0
  %v294 = vadd.f32 %v55, %v293
  %v295 = vpop.f32.mrf.mxu0
  %v296 = vadd.f32 %v55, %v295
  %297 = vmatmul.bf16.gmra.mxu0 %v158
  %v298 = vpop.f32.mrf.mxu0
  %v299 = vadd.f32 %v55, %v298
  %v300 = vpop.f32.mrf.mxu0
  %v301 = vadd.f32 %v55, %v300
  %302 = vmatmul.bf16.gmra.mxu0 %v161
  %v303 = vpop.f32.mrf.mxu0
  %v304 = vadd.f32 %v55, %v303
  %v305 = vpop.f32.mrf.mxu0
  %v306 = vadd.f32 %v55, %v305
  %307 = vmatmul.bf16.gmra.mxu0 %v164
  %v308 = vpop.f32.mrf.mxu0
  %v309 = vadd.f32 %v55, %v308
  %v310 = vpop.f32.mrf.mxu0
  %v311 = vadd.f32 %v55, %v310
  %312 = vdwg.mxu0
  %313 = vmatpush.bf16.msra.mxu0 0
  %314 = vmatpush.bf16.msra.mxu0 0
  %315 = vmatpush.bf16.msra.mxu0 0
  %316 = vmatpush.bf16.msra.mxu0 0
  %317 = vmatpush.bf16.msra.mxu0 0
  %318 = vmatpush.bf16.msra.mxu0 0
  %319 = vmatpush.bf16.msra.mxu0 %v132
  %320 = vmatpush.bf16.msra.mxu0 %v128
  %321 = vmatmul.bf16.gmra.mxu0 %v143
  %v322 = vpop.f32.mrf.mxu0
  %v323 = vadd.f32 %v56, %v322
  %v324 = vpop.f32.mrf.mxu0
  %v325 = vadd.f32 %v56, %v324
  %326 = vmatmul.bf16.gmra.mxu0 %v146
  %v327 = vpop.f32.mrf.mxu0
  %v328 = vadd.f32 %v56, %v327
  %v329 = vpop.f32.mrf.mxu0
  %v330 = vadd.f32 %v56, %v329
  %331 = vmatmul.bf16.gmra.mxu0 %v149
  %v332 = vpop.f32.mrf.mxu0
  %v333 = vadd.f32 %v56, %v332
  %v334 = vpop.f32.mrf.mxu0
  %v335 = vadd.f32 %v56, %v334
  %336 = vmatmul.bf16.gmra.mxu0 %v152
  %v337 = vpop.f32.mrf.mxu0
  %v338 = vadd.f32 %v56, %v337
  %v339 = vpop.f32.mrf.mxu0
  %v340 = vadd.f32 %v56, %v339
  %341 = vmatmul.bf16.gmra.mxu0 %v155
  %v342 = vpop.f32.mrf.mxu0
  %v343 = vadd.f32 %v56, %v342
  %v344 = vpop.f32.mrf.mxu0
  %v345 = vadd.f32 %v56, %v344
  %346 = vmatmul.bf16.gmra.mxu0 %v158
  %v347 = vpop.f32.mrf.mxu0
  %v348 = vadd.f32 %v56, %v347
  %v349 = vpop.f32.mrf.mxu0
  %v350 = vadd.f32 %v56, %v349
  %351 = vmatmul.bf16.gmra.mxu0 %v161
  %v352 = vpop.f32.mrf.mxu0
  %v353 = vadd.f32 %v56, %v352
  %v354 = vpop.f32.mrf.mxu0
  %v355 = vadd.f32 %v56, %v354
  %356 = vmatmul.bf16.gmra.mxu0 %v164
  %v357 = vpop.f32.mrf.mxu0
  %v358 = vadd.f32 %v56, %v357
  %v359 = vpop.f32.mrf.mxu0
  %v360 = vadd.f32 %v56, %v359
  %361 = vdwg.mxu0
  %v362 = vmax.f32 %v176, 0.0
  %v363 = vmax.f32 %v225, 0.0
  %v364 = vmax.f32 %v274, 0.0
  %v365 = vmax.f32 %v323, 0.0
  %v366 = vmax.f32 %v178, 0.0
  %v367 = vmax.f32 %v227, 0.0
  %v368 = vmax.f32 %v276, 0.0
  %v369 = vmax.f32 %v325, 0.0
  %v370 = vmax.f32 %v181, 0.0
  %v371 = vmax.f32 %v230, 0.0
  %v372 = vmax.f32 %v279, 0.0
  %v373 = vmax.f32 %v328, 0.0
  %v374 = vmax.f32 %v183, 0.0
  %v375 = vmax.f32 %v232, 0.0
  %v376 = vmax.f32 %v281, 0.0
  %v377 = vmax.f32 %v330, 0.0
  %v378 = vmax.f32 %v186, 0.0
  %v379 = vmax.f32 %v235, 0.0
  %v380 = vmax.f32 %v284, 0.0
  %v381 = vmax.f32 %v333, 0.0
  %v382 = vmax.f32 %v188, 0.0
  %v383 = vmax.f32 %v237, 0.0
  %v384 = vmax.f32 %v286, 0.0
  %v385 = vmax.f32 %v335, 0.0
  %v386 = vmax.f32 %v191, 0.0
  %v387 = vmax.f32 %v240, 0.0
  %v388 = vmax.f32 %v289, 0.0
  %v389 = vmax.f32 %v338, 0.0
  %v390 = vmax.f32 %v193, 0.0
  %v391 = vmax.f32 %v242, 0.0
  %v392 = vmax.f32 %v291, 0.0
  %v393 = vmax.f32 %v340, 0.0
  %v394 = vmax.f32 %v196, 0.0
  %v395 = vmax.f32 %v245, 0.0
  %v396 = vmax.f32 %v294, 0.0
  %v397 = vmax.f32 %v343, 0.0
  %v398 = vmax.f32 %v198, 0.0
  %v399 = vmax.f32 %v247, 0.0
  %v400 = vmax.f32 %v296, 0.0
  %v401 = vmax.f32 %v345, 0.0
  %v402 = vmax.f32 %v201, 0.0
  %v403 = vmax.f32 %v250, 0.0
  %v404 = vmax.f32 %v299, 0.0
  %v405 = vmax.f32 %v348, 0.0
  %v406 = vmax.f32 %v203, 0.0
  %v407 = vmax.f32 %v252, 0.0
  %v408 = vmax.f32 %v301, 0.0
  %v409 = vmax.f32 %v350, 0.0
  %v410 = vmax.f32 %v206, 0.0
  %v411 = vmax.f32 %v255, 0.0
  %v412 = vmax.f32 %v304, 0.0
  %v413 = vmax.f32 %v353, 0.0
  %v414 = vmax.f32 %v208, 0.0
  %v415 = vmax.f32 %v257, 0.0
  %v416 = vmax.f32 %v306, 0.0
  %v417 = vmax.f32 %v355, 0.0
  %v418 = vmax.f32 %v211, 0.0
  %v419 = vmax.f32 %v260, 0.0
  %v420 = vmax.f32 %v309, 0.0
  %v421 = vmax.f32 %v358, 0.0
  %v422 = vmax.f32 %v213, 0.0
  %v423 = vmax.f32 %v262, 0.0
  %v424 = vmax.f32 %v311, 0.0
  %v425 = vmax.f32 %v360, 0.0
  %v426 = vpack.c.bf16 %v366, %v362
  %v427 = vpack.c.bf16 %v367, %v363
  %v428 = vpack.c.bf16 %v368, %v364
  %v429 = vpack.c.bf16 %v369, %v365
  %v430 = vpack.c.bf16 %v374, %v370
  %v431 = vpack.c.bf16 %v375, %v371
  %v432 = vpack.c.bf16 %v376, %v372
  %v433 = vpack.c.bf16 %v377, %v373
  %v434 = vpack.c.bf16 %v382, %v378
  %v435 = vpack.c.bf16 %v383, %v379
  %v436 = vpack.c.bf16 %v384, %v380
  %v437 = vpack.c.bf16 %v385, %v381
  %v438 = vpack.c.bf16 %v390, %v386
  %v439 = vpack.c.bf16 %v391, %v387
  %v440 = vpack.c.bf16 %v392, %v388
  %v441 = vpack.c.bf16 %v393, %v389
  %v442 = vpack.c.bf16 %v398, %v394
  %v443 = vpack.c.bf16 %v399, %v395
  %v444 = vpack.c.bf16 %v400, %v396
  %v445 = vpack.c.bf16 %v401, %v397
  %v446 = vpack.c.bf16 %v406, %v402
  %v447 = vpack.c.bf16 %v407, %v403
  %v448 = vpack.c.bf16 %v408, %v404
  %v449 = vpack.c.bf16 %v409, %v405
  %v450 = vpack.c.bf16 %v414, %v410
  %v451 = vpack.c.bf16 %v415, %v411
  %v452 = vpack.c.bf16 %v416, %v412
  %v453 = vpack.c.bf16 %v417, %v413
  %v454 = vpack.c.bf16 %v422, %v418
  %v455 = vpack.c.bf16 %v423, %v419
  %v456 = vpack.c.bf16 %v424, %v420
  %v457 = vpack.c.bf16 %v425, %v421
  %v458 = vld [vmem:[%s3] sm:$0xff]
  %v459 = vld [vmem:[%s3 + $0x8] sm:$0xff]
  %v460 = vld [vmem:[%s3 + $0x10] sm:$0xff]
  %v461 = vld [vmem:[%s3 + $0x18] sm:$0xff]
  %v462 = vld [vmem:[%s3 + $0x20] sm:$0xff]
  %v463 = vld [vmem:[%s3 + $0x28] sm:$0xff]
  %v464 = vld [vmem:[%s3 + $0x30] sm:$0xff]
  %v465 = vld [vmem:[%s3 + $0x38] sm:$0xff]
  %v466 = vld [vmem:[%s3 + $0x40] sm:$0xff]
  %v467 = vld [vmem:[%s3 + $0x48] sm:$0xff]
  %v468 = vld [vmem:[%s3 + $0x50] sm:$0xff]
  %v469 = vld [vmem:[%s3 + $0x58] sm:$0xff]
  %v470 = vld [vmem:[%s3 + $0x60] sm:$0xff]
  %v471 = vld [vmem:[%s3 + $0x68] sm:$0xff]
  %v472 = vld [vmem:[%s3 + $0x70] sm:$0xff]
  %v473 = vld [vmem:[%s3 + $0x78] sm:$0xff]
  %v474 = vld [vmem:[%s3 + $0x80] sm:$0xff]
  %v475 = vld [vmem:[%s3 + $0x88] sm:$0xff]
  %v476 = vld [vmem:[%s3 + $0x90] sm:$0xff]
  %v477 = vld [vmem:[%s3 + $0x98] sm:$0xff]
  %v478 = vld [vmem:[%s3 + $0xa0] sm:$0xff]
  %v479 = vld [vmem:[%s3 + $0xa8] sm:$0xff]
  %v480 = vld [vmem:[%s3 + $0xb0] sm:$0xff]
  %v481 = vld [vmem:[%s3 + $0xb8] sm:$0xff]
  %v482 = vld [vmem:[%s3 + $0xc0] sm:$0xff]
  %v483 = vld [vmem:[%s3 + $0xc8] sm:$0xff]
  %v484 = vld [vmem:[%s3 + $0xd0] sm:$0xff]
  %v485 = vld [vmem:[%s3 + $0xd8] sm:$0xff]
  %v486 = vld [vmem:[%s3 + $0xe0] sm:$0xff]
  %v487 = vld [vmem:[%s3 + $0xe8] sm:$0xff]
  %v488 = vld [vmem:[%s3 + $0xf0] sm:$0xff]
  %v489 = vld [vmem:[%s3 + $0xf8] sm:$0xff]
  %v490 = vld [vmem:[%s3 + $0x100] sm:$0xff]
  %v491 = vld [vmem:[%s3 + $0x108] sm:$0xff]
  %v492 = vld [vmem:[%s3 + $0x110] sm:$0xff]
  %v493 = vld [vmem:[%s3 + $0x118] sm:$0xff]
  %v494 = vld [vmem:[%s3 + $0x120] sm:$0xff]
  %v495 = vld [vmem:[%s3 + $0x128] sm:$0xff]
  %v496 = vld [vmem:[%s3 + $0x130] sm:$0xff]
  %v497 = vld [vmem:[%s3 + $0x138] sm:$0xff]
  %v498 = vld [vmem:[%s3 + $0x140] sm:$0xff]
  %v499 = vld [vmem:[%s3 + $0x148] sm:$0xff]
  %v500 = vld [vmem:[%s3 + $0x150] sm:$0xff]
  %v501 = vld [vmem:[%s3 + $0x158] sm:$0xff]
  %v502 = vld [vmem:[%s3 + $0x160] sm:$0xff]
  %v503 = vld [vmem:[%s3 + $0x168] sm:$0xff]
  %v504 = vld [vmem:[%s3 + $0x170] sm:$0xff]
  %v505 = vld [vmem:[%s3 + $0x178] sm:$0xff]
  %v506 = vld [vmem:[%s3 + $0x180] sm:$0xff]
  %v507 = vld [vmem:[%s3 + $0x188] sm:$0xff]
  %v508 = vld [vmem:[%s3 + $0x190] sm:$0xff]
  %v509 = vld [vmem:[%s3 + $0x198] sm:$0xff]
  %v510 = vld [vmem:[%s3 + $0x1a0] sm:$0xff]
  %v511 = vld [vmem:[%s3 + $0x1a8] sm:$0xff]
  %v512 = vld [vmem:[%s3 + $0x1b0] sm:$0xff]
  %v513 = vld [vmem:[%s3 + $0x1b8] sm:$0xff]
  %v514 = vld [vmem:[%s3 + $0x1c0] sm:$0xff]
  %v515 = vld [vmem:[%s3 + $0x1c8] sm:$0xff]
  %v516 = vld [vmem:[%s3 + $0x1d0] sm:$0xff]
  %v517 = vld [vmem:[%s3 + $0x1d8] sm:$0xff]
  %v518 = vld [vmem:[%s3 + $0x1e0] sm:$0xff]
  %v519 = vld [vmem:[%s3 + $0x1e8] sm:$0xff]
  %v520 = vld [vmem:[%s3 + $0x1f0] sm:$0xff]
  %v521 = vld [vmem:[%s3 + $0x1f8] sm:$0xff]
  %v522 = vld [vmem:[%s4] sm:$0x3]
  %v524 = vperm.slane %v522, 0
  %v525 = vperm.slane %v522, 1
  %v592 = vunpack.c.l.b16 %v458
  %v593 = vunpack.c.h.b16 %v458
  %v594 = vunpack.c.l.b16 %v459
  %v595 = vunpack.c.h.b16 %v459
  %v596 = vunpack.c.l.b16 %v460
  %v597 = vunpack.c.h.b16 %v460
  %v598 = vunpack.c.l.b16 %v461
  %v599 = vunpack.c.h.b16 %v461
  %v600 = vunpack.c.l.b16 %v462
  %v601 = vunpack.c.h.b16 %v462
  %v602 = vunpack.c.l.b16 %v463
  %v603 = vunpack.c.h.b16 %v463
  %v604 = vunpack.c.l.b16 %v464
  %v605 = vunpack.c.h.b16 %v464
  %v606 = vunpack.c.l.b16 %v465
  %v607 = vunpack.c.h.b16 %v465
  %v608 = vunpack.c.l.b16 %v466
  %v609 = vunpack.c.h.b16 %v466
  %v610 = vunpack.c.l.b16 %v467
  %v611 = vunpack.c.h.b16 %v467
  %v612 = vunpack.c.l.b16 %v468
  %v613 = vunpack.c.h.b16 %v468
  %v614 = vunpack.c.l.b16 %v469
  %v615 = vunpack.c.h.b16 %v469
  %v616 = vunpack.c.l.b16 %v470
  %v617 = vunpack.c.h.b16 %v470
  %v618 = vunpack.c.l.b16 %v471
  %v619 = vunpack.c.h.b16 %v471
  %v620 = vunpack.c.l.b16 %v472
  %v621 = vunpack.c.h.b16 %v472
  %v622 = vunpack.c.l.b16 %v473
  %v623 = vunpack.c.h.b16 %v473
  %v624 = vunpack.c.l.b16 %v474
  %v625 = vunpack.c.h.b16 %v474
  %v626 = vunpack.c.l.b16 %v475
  %v627 = vunpack.c.h.b16 %v475
  %v628 = vunpack.c.l.b16 %v476
  %v629 = vunpack.c.h.b16 %v476
  %v630 = vunpack.c.l.b16 %v477
  %v631 = vunpack.c.h.b16 %v477
  %v632 = vunpack.c.l.b16 %v478
  %v633 = vunpack.c.h.b16 %v478
  %v634 = vunpack.c.l.b16 %v479
  %v635 = vunpack.c.h.b16 %v479
  %v636 = vunpack.c.l.b16 %v480
  %v637 = vunpack.c.h.b16 %v480
  %v638 = vunpack.c.l.b16 %v481
  %v639 = vunpack.c.h.b16 %v481
  %v640 = vunpack.c.l.b16 %v482
  %v641 = vunpack.c.h.b16 %v482
  %v642 = vunpack.c.l.b16 %v483
  %v643 = vunpack.c.h.b16 %v483
  %v644 = vunpack.c.l.b16 %v484
  %v645 = vunpack.c.h.b16 %v484
  %v646 = vunpack.c.l.b16 %v485
  %v647 = vunpack.c.h.b16 %v485
  %v648 = vunpack.c.l.b16 %v486
  %v649 = vunpack.c.h.b16 %v486
  %v650 = vunpack.c.l.b16 %v487
  %v651 = vunpack.c.h.b16 %v487
  %v652 = vunpack.c.l.b16 %v488
  %v653 = vunpack.c.h.b16 %v488
  %v654 = vunpack.c.l.b16 %v489
  %v655 = vunpack.c.h.b16 %v489
  %v656 = vunpack.c.l.b16 %v490
  %v657 = vunpack.c.h.b16 %v490
  %v658 = vunpack.c.l.b16 %v491
  %v659 = vunpack.c.h.b16 %v491
  %v660 = vunpack.c.l.b16 %v492
  %v661 = vunpack.c.h.b16 %v492
  %v662 = vunpack.c.l.b16 %v493
  %v663 = vunpack.c.h.b16 %v493
  %v664 = vunpack.c.l.b16 %v494
  %v665 = vunpack.c.h.b16 %v494
  %v666 = vunpack.c.l.b16 %v495
  %v667 = vunpack.c.h.b16 %v495
  %v668 = vunpack.c.l.b16 %v496
  %v669 = vunpack.c.h.b16 %v496
  %v670 = vunpack.c.l.b16 %v497
  %v671 = vunpack.c.h.b16 %v497
  %v672 = vunpack.c.l.b16 %v498
  %v673 = vunpack.c.h.b16 %v498
  %v674 = vunpack.c.l.b16 %v499
  %v675 = vunpack.c.h.b16 %v499
  %v676 = vunpack.c.l.b16 %v500
  %v677 = vunpack.c.h.b16 %v500
  %v678 = vunpack.c.l.b16 %v501
  %v679 = vunpack.c.h.b16 %v501
  %v680 = vunpack.c.l.b16 %v502
  %v681 = vunpack.c.h.b16 %v502
  %v682 = vunpack.c.l.b16 %v503
  %v683 = vunpack.c.h.b16 %v503
  %v684 = vunpack.c.l.b16 %v504
  %v685 = vunpack.c.h.b16 %v504
  %v686 = vunpack.c.l.b16 %v505
  %v687 = vunpack.c.h.b16 %v505
  %v688 = vunpack.c.l.b16 %v506
  %v689 = vunpack.c.h.b16 %v506
  %v690 = vunpack.c.l.b16 %v507
  %v691 = vunpack.c.h.b16 %v507
  %v692 = vunpack.c.l.b16 %v508
  %v693 = vunpack.c.h.b16 %v508
  %v694 = vunpack.c.l.b16 %v509
  %v695 = vunpack.c.h.b16 %v509
  %v696 = vunpack.c.l.b16 %v510
  %v697 = vunpack.c.h.b16 %v510
  %v698 = vunpack.c.l.b16 %v511
  %v699 = vunpack.c.h.b16 %v511
  %v700 = vunpack.c.l.b16 %v512
  %v701 = vunpack.c.h.b16 %v512
  %v702 = vunpack.c.l.b16 %v513
  %v703 = vunpack.c.h.b16 %v513
  %v704 = vunpack.c.l.b16 %v514
  %v705 = vunpack.c.h.b16 %v514
  %v706 = vunpack.c.l.b16 %v515
  %v707 = vunpack.c.h.b16 %v515
  %v708 = vunpack.c.l.b16 %v516
  %v709 = vunpack.c.h.b16 %v516
  %v710 = vunpack.c.l.b16 %v517
  %v711 = vunpack.c.h.b16 %v517
  %v712 = vunpack.c.l.b16 %v518
  %v713 = vunpack.c.h.b16 %v518
  %v714 = vunpack.c.l.b16 %v519
  %v715 = vunpack.c.h.b16 %v519
  %v716 = vunpack.c.l.b16 %v520
  %v717 = vunpack.c.h.b16 %v520
  %v718 = vunpack.c.l.b16 %v521
  %v719 = vunpack.c.h.b16 %v521
  %v720 = vpack.c.b16 %v594, %v592
  %v721 = vpack.c.b16 %v595, %v593
  %v722 = vpack.c.b16 %v598, %v596
  %v723 = vpack.c.b16 %v599, %v597
  %v724 = vpack.c.b16 %v602, %v600
  %v725 = vpack.c.b16 %v603, %v601
  %v726 = vpack.c.b16 %v606, %v604
  %v727 = vpack.c.b16 %v607, %v605
  %v728 = vpack.c.b16 %v610, %v608
  %v729 = vpack.c.b16 %v611, %v609
  %v730 = vpack.c.b16 %v614, %v612
  %v731 = vpack.c.b16 %v615, %v613
  %v732 = vpack.c.b16 %v618, %v616
  %v733 = vpack.c.b16 %v619, %v617
  %v734 = vpack.c.b16 %v622, %v620
  %v735 = vpack.c.b16 %v623, %v621
  %v736 = vpack.c.b16 %v626, %v624
  %v737 = vpack.c.b16 %v627, %v625
  %v738 = vpack.c.b16 %v630, %v628
  %v739 = vpack.c.b16 %v631, %v629
  %v740 = vpack.c.b16 %v634, %v632
  %v741 = vpack.c.b16 %v635, %v633
  %v742 = vpack.c.b16 %v638, %v636
  %v743 = vpack.c.b16 %v639, %v637
  %v744 = vpack.c.b16 %v642, %v640
  %v745 = vpack.c.b16 %v643, %v641
  %v746 = vpack.c.b16 %v646, %v644
  %v747 = vpack.c.b16 %v647, %v645
  %v748 = vpack.c.b16 %v650, %v648
  %v749 = vpack.c.b16 %v651, %v649
  %v750 = vpack.c.b16 %v654, %v652
  %v751 = vpack.c.b16 %v655, %v653
  %v752 = vpack.c.b16 %v658, %v656
  %v753 = vpack.c.b16 %v659, %v657
  %v754 = vpack.c.b16 %v662, %v660
  %v755 = vpack.c.b16 %v663, %v661
  %v756 = vpack.c.b16 %v666, %v664
  %v757 = vpack.c.b16 %v667, %v665
  %v758 = vpack.c.b16 %v670, %v668
  %v759 = vpack.c.b16 %v671, %v669
  %v760 = vpack.c.b16 %v674, %v672
  %v761 = vpack.c.b16 %v675, %v673
  %v762 = vpack.c.b16 %v678, %v676
  %v763 = vpack.c.b16 %v679, %v677
  %v764 = vpack.c.b16 %v682, %v680
  %v765 = vpack.c.b16 %v683, %v681
  %v766 = vpack.c.b16 %v686, %v684
  %v767 = vpack.c.b16 %v687, %v685
  %v768 = vpack.c.b16 %v690, %v688
  %v769 = vpack.c.b16 %v691, %v689
  %v770 = vpack.c.b16 %v694, %v692
  %v771 = vpack.c.b16 %v695, %v693
  %v772 = vpack.c.b16 %v698, %v696
  %v773 = vpack.c.b16 %v699, %v697
  %v774 = vpack.c.b16 %v702, %v700
  %v775 = vpack.c.b16 %v703, %v701
  %v776 = vpack.c.b16 %v706, %v704
  %v777 = vpack.c.b16 %v707, %v705
  %v778 = vpack.c.b16 %v710, %v708
  %v779 = vpack.c.b16 %v711, %v709
  %v780 = vpack.c.b16 %v714, %v712
  %v781 = vpack.c.b16 %v715, %v713
  %v782 = vpack.c.b16 %v718, %v716
  %v783 = vpack.c.b16 %v719, %v717
  %848 = vmatpush.bf16.msra.mxu0 %v734
  %849 = vmatpush.bf16.msra.mxu0 %v732
  %850 = vmatpush.bf16.msra.mxu0 %v730
  %851 = vmatpush.bf16.msra.mxu0 %v728
  %852 = vmatpush.bf16.msra.mxu0 %v726
  %853 = vmatpush.bf16.msra.mxu0 %v724
  %854 = vmatpush.bf16.msra.mxu0 %v722
  %855 = vmatpush.bf16.msra.mxu0 %v720
  %856 = vmatmul.bf16.gmra.mxu0 %v426
  %v857 = vpop.f32.mrf.mxu0
  %v858 = vadd.f32 %v524, %v857
  %v859 = vpop.f32.mrf.mxu0
  %v860 = vadd.f32 %v524, %v859
  %861 = vmatmul.bf16.gmra.mxu0 %v430
  %v862 = vpop.f32.mrf.mxu0
  %v863 = vadd.f32 %v524, %v862
  %v864 = vpop.f32.mrf.mxu0
  %v865 = vadd.f32 %v524, %v864
  %866 = vmatmul.bf16.gmra.mxu0 %v434
  %v867 = vpop.f32.mrf.mxu0
  %v868 = vadd.f32 %v524, %v867
  %v869 = vpop.f32.mrf.mxu0
  %v870 = vadd.f32 %v524, %v869
  %871 = vmatmul.bf16.gmra.mxu0 %v438
  %v872 = vpop.f32.mrf.mxu0
  %v873 = vadd.f32 %v524, %v872
  %v874 = vpop.f32.mrf.mxu0
  %v875 = vadd.f32 %v524, %v874
  %876 = vmatmul.bf16.gmra.mxu0 %v442
  %v877 = vpop.f32.mrf.mxu0
  %v878 = vadd.f32 %v524, %v877
  %v879 = vpop.f32.mrf.mxu0
  %v880 = vadd.f32 %v524, %v879
  %881 = vmatmul.bf16.gmra.mxu0 %v446
  %v882 = vpop.f32.mrf.mxu0
  %v883 = vadd.f32 %v524, %v882
  %v884 = vpop.f32.mrf.mxu0
  %v885 = vadd.f32 %v524, %v884
  %886 = vmatmul.bf16.gmra.mxu0 %v450
  %v887 = vpop.f32.mrf.mxu0
  %v888 = vadd.f32 %v524, %v887
  %v889 = vpop.f32.mrf.mxu0
  %v890 = vadd.f32 %v524, %v889
  %891 = vmatmul.bf16.gmra.mxu0 %v454
  %v892 = vpop.f32.mrf.mxu0
  %v893 = vadd.f32 %v524, %v892
  %v894 = vpop.f32.mrf.mxu0
  %v895 = vadd.f32 %v524, %v894
  %896 = vdwg.mxu0
  %897 = vmatpush.bf16.msra.mxu0 %v750
  %898 = vmatpush.bf16.msra.mxu0 %v748
  %899 = vmatpush.bf16.msra.mxu0 %v746
  %900 = vmatpush.bf16.msra.mxu0 %v744
  %901 = vmatpush.bf16.msra.mxu0 %v742
  %902 = vmatpush.bf16.msra.mxu0 %v740
  %903 = vmatpush.bf16.msra.mxu0 %v738
  %904 = vmatpush.bf16.msra.mxu0 %v736
  %905 = vmatmul.bf16.gmra.mxu0 %v427
  %v906 = vpop.f32.mrf.mxu0
  %v907 = vadd.f32 %v858, %v906
  %v908 = vpop.f32.mrf.mxu0
  %v909 = vadd.f32 %v860, %v908
  %910 = vmatmul.bf16.gmra.mxu0 %v431
  %v911 = vpop.f32.mrf.mxu0
  %v912 = vadd.f32 %v863, %v911
  %v913 = vpop.f32.mrf.mxu0
  %v914 = vadd.f32 %v865, %v913
  %915 = vmatmul.bf16.gmra.mxu0 %v435
  %v916 = vpop.f32.mrf.mxu0
  %v917 = vadd.f32 %v868, %v916
  %v918 = vpop.f32.mrf.mxu0
  %v919 = vadd.f32 %v870, %v918
  %920 = vmatmul.bf16.gmra.mxu0 %v439
  %v921 = vpop.f32.mrf.mxu0
  %v922 = vadd.f32 %v873, %v921
  %v923 = vpop.f32.mrf.mxu0
  %v924 = vadd.f32 %v875, %v923
  %925 = vmatmul.bf16.gmra.mxu0 %v443
  %v926 = vpop.f32.mrf.mxu0
  %v927 = vadd.f32 %v878, %v926
  %v928 = vpop.f32.mrf.mxu0
  %v929 = vadd.f32 %v880, %v928
  %930 = vmatmul.bf16.gmra.mxu0 %v447
  %v931 = vpop.f32.mrf.mxu0
  %v932 = vadd.f32 %v883, %v931
  %v933 = vpop.f32.mrf.mxu0
  %v934 = vadd.f32 %v885, %v933
  %935 = vmatmul.bf16.gmra.mxu0 %v451
  %v936 = vpop.f32.mrf.mxu0
  %v937 = vadd.f32 %v888, %v936
  %v938 = vpop.f32.mrf.mxu0
  %v939 = vadd.f32 %v890, %v938
  %940 = vmatmul.bf16.gmra.mxu0 %v455
  %v941 = vpop.f32.mrf.mxu0
  %v942 = vadd.f32 %v893, %v941
  %v943 = vpop.f32.mrf.mxu0
  %v944 = vadd.f32 %v895, %v943
  %945 = vdwg.mxu0
  %946 = vmatpush.bf16.msra.mxu0 %v766
  %947 = vmatpush.bf16.msra.mxu0 %v764
  %948 = vmatpush.bf16.msra.mxu0 %v762
  %949 = vmatpush.bf16.msra.mxu0 %v760
  %950 = vmatpush.bf16.msra.mxu0 %v758
  %951 = vmatpush.bf16.msra.mxu0 %v756
  %952 = vmatpush.bf16.msra.mxu0 %v754
  %953 = vmatpush.bf16.msra.mxu0 %v752
  %954 = vmatmul.bf16.gmra.mxu0 %v428
  %v955 = vpop.f32.mrf.mxu0
  %v956 = vadd.f32 %v907, %v955
  %v957 = vpop.f32.mrf.mxu0
  %v958 = vadd.f32 %v909, %v957
  %959 = vmatmul.bf16.gmra.mxu0 %v432
  %v960 = vpop.f32.mrf.mxu0
  %v961 = vadd.f32 %v912, %v960
  %v962 = vpop.f32.mrf.mxu0
  %v963 = vadd.f32 %v914, %v962
  %964 = vmatmul.bf16.gmra.mxu0 %v436
  %v965 = vpop.f32.mrf.mxu0
  %v966 = vadd.f32 %v917, %v965
  %v967 = vpop.f32.mrf.mxu0
  %v968 = vadd.f32 %v919, %v967
  %969 = vmatmul.bf16.gmra.mxu0 %v440
  %v970 = vpop.f32.mrf.mxu0
  %v971 = vadd.f32 %v922, %v970
  %v972 = vpop.f32.mrf.mxu0
  %v973 = vadd.f32 %v924, %v972
  %974 = vmatmul.bf16.gmra.mxu0 %v444
  %v975 = vpop.f32.mrf.mxu0
  %v976 = vadd.f32 %v927, %v975
  %v977 = vpop.f32.mrf.mxu0
  %v978 = vadd.f32 %v929, %v977
  %979 = vmatmul.bf16.gmra.mxu0 %v448
  %v980 = vpop.f32.mrf.mxu0
  %v981 = vadd.f32 %v932, %v980
  %v982 = vpop.f32.mrf.mxu0
  %v983 = vadd.f32 %v934, %v982
  %984 = vmatmul.bf16.gmra.mxu0 %v452
  %v985 = vpop.f32.mrf.mxu0
  %v986 = vadd.f32 %v937, %v985
  %v987 = vpop.f32.mrf.mxu0
  %v988 = vadd.f32 %v939, %v987
  %989 = vmatmul.bf16.gmra.mxu0 %v456
  %v990 = vpop.f32.mrf.mxu0
  %v991 = vadd.f32 %v942, %v990
  %v992 = vpop.f32.mrf.mxu0
  %v993 = vadd.f32 %v944, %v992
  %994 = vdwg.mxu0
  %995 = vmatpush.bf16.msra.mxu0 %v782
  %996 = vmatpush.bf16.msra.mxu0 %v780
  %997 = vmatpush.bf16.msra.mxu0 %v778
  %998 = vmatpush.bf16.msra.mxu0 %v776
  %999 = vmatpush.bf16.msra.mxu0 %v774
  %1000 = vmatpush.bf16.msra.mxu0 %v772
  %1001 = vmatpush.bf16.msra.mxu0 %v770
  %1002 = vmatpush.bf16.msra.mxu0 %v768
  %1003 = vmatmul.bf16.gmra.mxu0 %v429
  %v1004 = vpop.f32.mrf.mxu0
  %v1005 = vadd.f32 %v956, %v1004
  %v1006 = vpop.f32.mrf.mxu0
  %v1007 = vadd.f32 %v958, %v1006
  %1008 = vmatmul.bf16.gmra.mxu0 %v433
  %v1009 = vpop.f32.mrf.mxu0
  %v1010 = vadd.f32 %v961, %v1009
  %v1011 = vpop.f32.mrf.mxu0
  %v1012 = vadd.f32 %v963, %v1011
  %1013 = vmatmul.bf16.gmra.mxu0 %v437
  %v1014 = vpop.f32.mrf.mxu0
  %v1015 = vadd.f32 %v966, %v1014
  %v1016 = vpop.f32.mrf.mxu0
  %v1017 = vadd.f32 %v968, %v1016
  %1018 = vmatmul.bf16.gmra.mxu0 %v441
  %v1019 = vpop.f32.mrf.mxu0
  %v1020 = vadd.f32 %v971, %v1019
  %v1021 = vpop.f32.mrf.mxu0
  %v1022 = vadd.f32 %v973, %v1021
  %1023 = vmatmul.bf16.gmra.mxu0 %v445
  %v1024 = vpop.f32.mrf.mxu0
  %v1025 = vadd.f32 %v976, %v1024
  %v1026 = vpop.f32.mrf.mxu0
  %v1027 = vadd.f32 %v978, %v1026
  %1028 = vmatmul.bf16.gmra.mxu0 %v449
  %v1029 = vpop.f32.mrf.mxu0
  %v1030 = vadd.f32 %v981, %v1029
  %v1031 = vpop.f32.mrf.mxu0
  %v1032 = vadd.f32 %v983, %v1031
  %1033 = vmatmul.bf16.gmra.mxu0 %v453
  %v1034 = vpop.f32.mrf.mxu0
  %v1035 = vadd.f32 %v986, %v1034
  %v1036 = vpop.f32.mrf.mxu0
  %v1037 = vadd.f32 %v988, %v1036
  %1038 = vmatmul.bf16.gmra.mxu0 %v457
  %v1039 = vpop.f32.mrf.mxu0
  %v1040 = vadd.f32 %v991, %v1039
  %v1041 = vpop.f32.mrf.mxu0
  %v1042 = vadd.f32 %v993, %v1041
  %1043 = vdwg.mxu0
  %1044 = vmatpush.bf16.msra.mxu0 %v735
  %1045 = vmatpush.bf16.msra.mxu0 %v733
  %1046 = vmatpush.bf16.msra.mxu0 %v731
  %1047 = vmatpush.bf16.msra.mxu0 %v729
  %1048 = vmatpush.bf16.msra.mxu0 %v727
  %1049 = vmatpush.bf16.msra.mxu0 %v725
  %1050 = vmatpush.bf16.msra.mxu0 %v723
  %1051 = vmatpush.bf16.msra.mxu0 %v721
  %1052 = vmatmul.bf16.gmra.mxu0 %v426
  %v1053 = vpop.f32.mrf.mxu0
  %v1054 = vadd.f32 %v525, %v1053
  %v1055 = vpop.f32.mrf.mxu0
  %v1056 = vadd.f32 %v525, %v1055
  %1057 = vmatmul.bf16.gmra.mxu0 %v430
  %v1058 = vpop.f32.mrf.mxu0
  %v1059 = vadd.f32 %v525, %v1058
  %v1060 = vpop.f32.mrf.mxu0
  %v1061 = vadd.f32 %v525, %v1060
  %1062 = vmatmul.bf16.gmra.mxu0 %v434
  %v1063 = vpop.f32.mrf.mxu0
  %v1064 = vadd.f32 %v525, %v1063
  %v1065 = vpop.f32.mrf.mxu0
  %v1066 = vadd.f32 %v525, %v1065
  %1067 = vmatmul.bf16.gmra.mxu0 %v438
  %v1068 = vpop.f32.mrf.mxu0
  %v1069 = vadd.f32 %v525, %v1068
  %v1070 = vpop.f32.mrf.mxu0
  %v1071 = vadd.f32 %v525, %v1070
  %1072 = vmatmul.bf16.gmra.mxu0 %v442
  %v1073 = vpop.f32.mrf.mxu0
  %v1074 = vadd.f32 %v525, %v1073
  %v1075 = vpop.f32.mrf.mxu0
  %v1076 = vadd.f32 %v525, %v1075
  %1077 = vmatmul.bf16.gmra.mxu0 %v446
  %v1078 = vpop.f32.mrf.mxu0
  %v1079 = vadd.f32 %v525, %v1078
  %v1080 = vpop.f32.mrf.mxu0
  %v1081 = vadd.f32 %v525, %v1080
  %1082 = vmatmul.bf16.gmra.mxu0 %v450
  %v1083 = vpop.f32.mrf.mxu0
  %v1084 = vadd.f32 %v525, %v1083
  %v1085 = vpop.f32.mrf.mxu0
  %v1086 = vadd.f32 %v525, %v1085
  %1087 = vmatmul.bf16.gmra.mxu0 %v454
  %v1088 = vpop.f32.mrf.mxu0
  %v1089 = vadd.f32 %v525, %v1088
  %v1090 = vpop.f32.mrf.mxu0
  %v1091 = vadd.f32 %v525, %v1090
  %1092 = vdwg.mxu0
  %1093 = vmatpush.bf16.msra.mxu0 %v751
  %1094 = vmatpush.bf16.msra.mxu0 %v749
  %1095 = vmatpush.bf16.msra.mxu0 %v747
  %1096 = vmatpush.bf16.msra.mxu0 %v745
  %1097 = vmatpush.bf16.msra.mxu0 %v743
  %1098 = vmatpush.bf16.msra.mxu0 %v741
  %1099 = vmatpush.bf16.msra.mxu0 %v739
  %1100 = vmatpush.bf16.msra.mxu0 %v737
  %1101 = vmatmul.bf16.gmra.mxu0 %v427
  %v1102 = vpop.f32.mrf.mxu0
  %v1103 = vadd.f32 %v1054, %v1102
  %v1104 = vpop.f32.mrf.mxu0
  %v1105 = vadd.f32 %v1056, %v1104
  %1106 = vmatmul.bf16.gmra.mxu0 %v431
  %v1107 = vpop.f32.mrf.mxu0
  %v1108 = vadd.f32 %v1059, %v1107
  %v1109 = vpop.f32.mrf.mxu0
  %v1110 = vadd.f32 %v1061, %v1109
  %1111 = vmatmul.bf16.gmra.mxu0 %v435
  %v1112 = vpop.f32.mrf.mxu0
  %v1113 = vadd.f32 %v1064, %v1112
  %v1114 = vpop.f32.mrf.mxu0
  %v1115 = vadd.f32 %v1066, %v1114
  %1116 = vmatmul.bf16.gmra.mxu0 %v439
  %v1117 = vpop.f32.mrf.mxu0
  %v1118 = vadd.f32 %v1069, %v1117
  %v1119 = vpop.f32.mrf.mxu0
  %v1120 = vadd.f32 %v1071, %v1119
  %1121 = vmatmul.bf16.gmra.mxu0 %v443
  %v1122 = vpop.f32.mrf.mxu0
  %v1123 = vadd.f32 %v1074, %v1122
  %v1124 = vpop.f32.mrf.mxu0
  %v1125 = vadd.f32 %v1076, %v1124
  %1126 = vmatmul.bf16.gmra.mxu0 %v447
  %v1127 = vpop.f32.mrf.mxu0
  %v1128 = vadd.f32 %v1079, %v1127
  %v1129 = vpop.f32.mrf.mxu0
  %v1130 = vadd.f32 %v1081, %v1129
  %1131 = vmatmul.bf16.gmra.mxu0 %v451
  %v1132 = vpop.f32.mrf.mxu0
  %v1133 = vadd.f32 %v1084, %v1132
  %v1134 = vpop.f32.mrf.mxu0
  %v1135 = vadd.f32 %v1086, %v1134
  %1136 = vmatmul.bf16.gmra.mxu0 %v455
  %v1137 = vpop.f32.mrf.mxu0
  %v1138 = vadd.f32 %v1089, %v1137
  %v1139 = vpop.f32.mrf.mxu0
  %v1140 = vadd.f32 %v1091, %v1139
  %1141 = vdwg.mxu0
  %1142 = vmatpush.bf16.msra.mxu0 %v767
  %1143 = vmatpush.bf16.msra.mxu0 %v765
  %1144 = vmatpush.bf16.msra.mxu0 %v763
  %1145 = vmatpush.bf16.msra.mxu0 %v761
  %1146 = vmatpush.bf16.msra.mxu0 %v759
  %1147 = vmatpush.bf16.msra.mxu0 %v757
  %1148 = vmatpush.bf16.msra.mxu0 %v755
  %1149 = vmatpush.bf16.msra.mxu0 %v753
  %1150 = vmatmul.bf16.gmra.mxu0 %v428
  %v1151 = vpop.f32.mrf.mxu0
  %v1152 = vadd.f32 %v1103, %v1151
  %v1153 = vpop.f32.mrf.mxu0
  %v1154 = vadd.f32 %v1105, %v1153
  %1155 = vmatmul.bf16.gmra.mxu0 %v432
  %v1156 = vpop.f32.mrf.mxu0
  %v1157 = vadd.f32 %v1108, %v1156
  %v1158 = vpop.f32.mrf.mxu0
  %v1159 = vadd.f32 %v1110, %v1158
  %1160 = vmatmul.bf16.gmra.mxu0 %v436
  %v1161 = vpop.f32.mrf.mxu0
  %v1162 = vadd.f32 %v1113, %v1161
  %v1163 = vpop.f32.mrf.mxu0
  %v1164 = vadd.f32 %v1115, %v1163
  %1165 = vmatmul.bf16.gmra.mxu0 %v440
  %v1166 = vpop.f32.mrf.mxu0
  %v1167 = vadd.f32 %v1118, %v1166
  %v1168 = vpop.f32.mrf.mxu0
  %v1169 = vadd.f32 %v1120, %v1168
  %1170 = vmatmul.bf16.gmra.mxu0 %v444
  %v1171 = vpop.f32.mrf.mxu0
  %v1172 = vadd.f32 %v1123, %v1171
  %v1173 = vpop.f32.mrf.mxu0
  %v1174 = vadd.f32 %v1125, %v1173
  %1175 = vmatmul.bf16.gmra.mxu0 %v448
  %v1176 = vpop.f32.mrf.mxu0
  %v1177 = vadd.f32 %v1128, %v1176
  %v1178 = vpop.f32.mrf.mxu0
  %v1179 = vadd.f32 %v1130, %v1178
  %1180 = vmatmul.bf16.gmra.mxu0 %v452
  %v1181 = vpop.f32.mrf.mxu0
  %v1182 = vadd.f32 %v1133, %v1181
  %v1183 = vpop.f32.mrf.mxu0
  %v1184 = vadd.f32 %v1135, %v1183
  %1185 = vmatmul.bf16.gmra.mxu0 %v456
  %v1186 = vpop.f32.mrf.mxu0
  %v1187 = vadd.f32 %v1138, %v1186
  %v1188 = vpop.f32.mrf.mxu0
  %v1189 = vadd.f32 %v1140, %v1188
  %1190 = vdwg.mxu0
  %1191 = vmatpush.bf16.msra.mxu0 %v783
  %1192 = vmatpush.bf16.msra.mxu0 %v781
  %1193 = vmatpush.bf16.msra.mxu0 %v779
  %1194 = vmatpush.bf16.msra.mxu0 %v777
  %1195 = vmatpush.bf16.msra.mxu0 %v775
  %1196 = vmatpush.bf16.msra.mxu0 %v773
  %1197 = vmatpush.bf16.msra.mxu0 %v771
  %1198 = vmatpush.bf16.msra.mxu0 %v769
  %1199 = vmatmul.bf16.gmra.mxu0 %v429
  %v1200 = vpop.f32.mrf.mxu0
  %v1201 = vadd.f32 %v1152, %v1200
  %v1202 = vpop.f32.mrf.mxu0
  %v1203 = vadd.f32 %v1154, %v1202
  %1204 = vmatmul.bf16.gmra.mxu0 %v433
  %v1205 = vpop.f32.mrf.mxu0
  %v1206 = vadd.f32 %v1157, %v1205
  %v1207 = vpop.f32.mrf.mxu0
  %v1208 = vadd.f32 %v1159, %v1207
  %1209 = vmatmul.bf16.gmra.mxu0 %v437
  %v1210 = vpop.f32.mrf.mxu0
  %v1211 = vadd.f32 %v1162, %v1210
  %v1212 = vpop.f32.mrf.mxu0
  %v1213 = vadd.f32 %v1164, %v1212
  %1214 = vmatmul.bf16.gmra.mxu0 %v441
  %v1215 = vpop.f32.mrf.mxu0
  %v1216 = vadd.f32 %v1167, %v1215
  %v1217 = vpop.f32.mrf.mxu0
  %v1218 = vadd.f32 %v1169, %v1217
  %1219 = vmatmul.bf16.gmra.mxu0 %v445
  %v1220 = vpop.f32.mrf.mxu0
  %v1221 = vadd.f32 %v1172, %v1220
  %v1222 = vpop.f32.mrf.mxu0
  %v1223 = vadd.f32 %v1174, %v1222
  %1224 = vmatmul.bf16.gmra.mxu0 %v449
  %v1225 = vpop.f32.mrf.mxu0
  %v1226 = vadd.f32 %v1177, %v1225
  %v1227 = vpop.f32.mrf.mxu0
  %v1228 = vadd.f32 %v1179, %v1227
  %1229 = vmatmul.bf16.gmra.mxu0 %v453
  %v1230 = vpop.f32.mrf.mxu0
  %v1231 = vadd.f32 %v1182, %v1230
  %v1232 = vpop.f32.mrf.mxu0
  %v1233 = vadd.f32 %v1184, %v1232
  %1234 = vmatmul.bf16.gmra.mxu0 %v457
  %v1235 = vpop.f32.mrf.mxu0
  %v1236 = vadd.f32 %v1187, %v1235
  %v1237 = vpop.f32.mrf.mxu0
  %v1238 = vadd.f32 %v1189, %v1237
  %1239 = vdwg.mxu0
  %v1240 = vmax.f32 %v1005, 0.0
  %v1241 = vmax.f32 %v1201, 0.0
  %v1242 = vmax.f32 %v1007, 0.0
  %v1243 = vmax.f32 %v1203, 0.0
  %v1244 = vmax.f32 %v1010, 0.0
  %v1245 = vmax.f32 %v1206, 0.0
  %v1246 = vmax.f32 %v1012, 0.0
  %v1247 = vmax.f32 %v1208, 0.0
  %v1248 = vmax.f32 %v1015, 0.0
  %v1249 = vmax.f32 %v1211, 0.0
  %v1250 = vmax.f32 %v1017, 0.0
  %v1251 = vmax.f32 %v1213, 0.0
  %v1252 = vmax.f32 %v1020, 0.0
  %v1253 = vmax.f32 %v1216, 0.0
  %v1254 = vmax.f32 %v1022, 0.0
  %v1255 = vmax.f32 %v1218, 0.0
  %v1256 = vmax.f32 %v1025, 0.0
  %v1257 = vmax.f32 %v1221, 0.0
  %v1258 = vmax.f32 %v1027, 0.0
  %v1259 = vmax.f32 %v1223, 0.0
  %v1260 = vmax.f32 %v1030, 0.0
  %v1261 = vmax.f32 %v1226, 0.0
  %v1262 = vmax.f32 %v1032, 0.0
  %v1263 = vmax.f32 %v1228, 0.0
  %v1264 = vmax.f32 %v1035, 0.0
  %v1265 = vmax.f32 %v1231, 0.0
  %v1266 = vmax.f32 %v1037, 0.0
  %v1267 = vmax.f32 %v1233, 0.0
  %v1268 = vmax.f32 %v1040, 0.0
  %v1269 = vmax.f32 %v1236, 0.0
  %v1270 = vmax.f32 %v1042, 0.0
  %v1271 = vmax.f32 %v1238, 0.0
  %v1272 = vpack.c.bf16 %v1242, %v1240
  %v1273 = vpack.c.bf16 %v1243, %v1241
  %v1274 = vpack.c.bf16 %v1246, %v1244
  %v1275 = vpack.c.bf16 %v1247, %v1245
  %v1276 = vpack.c.bf16 %v1250, %v1248
  %v1277 = vpack.c.bf16 %v1251, %v1249
  %v1278 = vpack.c.bf16 %v1254, %v1252
  %v1279 = vpack.c.bf16 %v1255, %v1253
  %v1280 = vpack.c.bf16 %v1258, %v1256
  %v1281 = vpack.c.bf16 %v1259, %v1257
  %v1282 = vpack.c.bf16 %v1262, %v1260
  %v1283 = vpack.c.bf16 %v1263, %v1261
  %v1284 = vpack.c.bf16 %v1266, %v1264
  %v1285 = vpack.c.bf16 %v1267, %v1265
  %v1286 = vpack.c.bf16 %v1270, %v1268
  %v1287 = vpack.c.bf16 %v1271, %v1269
  %v1288 = vld [vmem:[%s5] sm:$0xf]
  %v1289 = vld [vmem:[%s5 + $0x4] sm:$0xf]
  %v1290 = vld [vmem:[%s5 + $0x8] sm:$0xf]
  %v1291 = vld [vmem:[%s5 + $0xc] sm:$0xf]
  %v1292 = vld [vmem:[%s5 + $0x10] sm:$0xf]
  %v1293 = vld [vmem:[%s5 + $0x14] sm:$0xf]
  %v1294 = vld [vmem:[%s5 + $0x18] sm:$0xf]
  %v1295 = vld [vmem:[%s5 + $0x1c] sm:$0xf]
  %v1296 = vld [vmem:[%s5 + $0x20] sm:$0xf]
  %v1297 = vld [vmem:[%s5 + $0x24] sm:$0xf]
  %v1298 = vld [vmem:[%s5 + $0x28] sm:$0xf]
  %v1299 = vld [vmem:[%s5 + $0x2c] sm:$0xf]
  %v1300 = vld [vmem:[%s5 + $0x30] sm:$0xf]
  %v1301 = vld [vmem:[%s5 + $0x34] sm:$0xf]
  %v1302 = vld [vmem:[%s5 + $0x38] sm:$0xf]
  %v1303 = vld [vmem:[%s5 + $0x3c] sm:$0xf]
  %v1304 = vld [vmem:[%s5 + $0x40] sm:$0xf]
  %v1305 = vld [vmem:[%s5 + $0x44] sm:$0xf]
  %v1306 = vld [vmem:[%s5 + $0x48] sm:$0xf]
  %v1307 = vld [vmem:[%s5 + $0x4c] sm:$0xf]
  %v1308 = vld [vmem:[%s5 + $0x50] sm:$0xf]
  %v1309 = vld [vmem:[%s5 + $0x54] sm:$0xf]
  %v1310 = vld [vmem:[%s5 + $0x58] sm:$0xf]
  %v1311 = vld [vmem:[%s5 + $0x5c] sm:$0xf]
  %v1312 = vld [vmem:[%s5 + $0x60] sm:$0xf]
  %v1313 = vld [vmem:[%s5 + $0x64] sm:$0xf]
  %v1314 = vld [vmem:[%s5 + $0x68] sm:$0xf]
  %v1315 = vld [vmem:[%s5 + $0x6c] sm:$0xf]
  %v1316 = vld [vmem:[%s5 + $0x70] sm:$0xf]
  %v1317 = vld [vmem:[%s5 + $0x74] sm:$0xf]
  %v1318 = vld [vmem:[%s5 + $0x78] sm:$0xf]
  %v1319 = vld [vmem:[%s5 + $0x7c] sm:$0xf]
  %v1320 = vld [vmem:[%s6] sm:$0x1]
  %v1322 = vperm.slane %v1320, 0
  %v1356 = vunpack.c.l.b16 %v1288
  %v1357 = vunpack.c.l.b16 %v1289
  %v1358 = vunpack.c.l.b16 %v1290
  %v1359 = vunpack.c.l.b16 %v1291
  %v1360 = vunpack.c.l.b16 %v1292
  %v1361 = vunpack.c.l.b16 %v1293
  %v1362 = vunpack.c.l.b16 %v1294
  %v1363 = vunpack.c.l.b16 %v1295
  %v1364 = vunpack.c.l.b16 %v1296
  %v1365 = vunpack.c.l.b16 %v1297
  %v1366 = vunpack.c.l.b16 %v1298
  %v1367 = vunpack.c.l.b16 %v1299
  %v1368 = vunpack.c.l.b16 %v1300
  %v1369 = vunpack.c.l.b16 %v1301
  %v1370 = vunpack.c.l.b16 %v1302
  %v1371 = vunpack.c.l.b16 %v1303
  %v1372 = vunpack.c.l.b16 %v1304
  %v1373 = vunpack.c.l.b16 %v1305
  %v1374 = vunpack.c.l.b16 %v1306
  %v1375 = vunpack.c.l.b16 %v1307
  %v1376 = vunpack.c.l.b16 %v1308
  %v1377 = vunpack.c.l.b16 %v1309
  %v1378 = vunpack.c.l.b16 %v1310
  %v1379 = vunpack.c.l.b16 %v1311
  %v1380 = vunpack.c.l.b16 %v1312
  %v1381 = vunpack.c.l.b16 %v1313
  %v1382 = vunpack.c.l.b16 %v1314
  %v1383 = vunpack.c.l.b16 %v1315
  %v1384 = vunpack.c.l.b16 %v1316
  %v1385 = vunpack.c.l.b16 %v1317
  %v1386 = vunpack.c.l.b16 %v1318
  %v1387 = vunpack.c.l.b16 %v1319
  %v1388 = vpack.c.b16 %v1357, %v1356
  %v1389 = vpack.c.b16 %v1359, %v1358
  %v1390 = vpack.c.b16 %v1361, %v1360
  %v1391 = vpack.c.b16 %v1363, %v1362
  %v1392 = vpack.c.b16 %v1365, %v1364
  %v1393 = vpack.c.b16 %v1367, %v1366
  %v1394 = vpack.c.b16 %v1369, %v1368
  %v1395 = vpack.c.b16 %v1371, %v1370
  %v1396 = vpack.c.b16 %v1373, %v1372
  %v1397 = vpack.c.b16 %v1375, %v1374
  %v1398 = vpack.c.b16 %v1377, %v1376
  %v1399 = vpack.c.b16 %v1379, %v1378
  %v1400 = vpack.c.b16 %v1381, %v1380
  %v1401 = vpack.c.b16 %v1383, %v1382
  %v1402 = vpack.c.b16 %v1385, %v1384
  %v1403 = vpack.c.b16 %v1387, %v1386
  %1420 = vmatpush.bf16.msra.mxu0 %v1395
  %1421 = vmatpush.bf16.msra.mxu0 %v1394
  %1422 = vmatpush.bf16.msra.mxu0 %v1393
  %1423 = vmatpush.bf16.msra.mxu0 %v1392
  %1424 = vmatpush.bf16.msra.mxu0 %v1391
  %1425 = vmatpush.bf16.msra.mxu0 %v1390
  %1426 = vmatpush.bf16.msra.mxu0 %v1389
  %1427 = vmatpush.bf16.msra.mxu0 %v1388
  %1428 = vmatmul.bf16.gmra.mxu0 %v1272
  %v1429 = vpop.f32.mrf.mxu0
  %v1430 = vadd.f32 %v1322, %v1429
  %v1431 = vpop.f32.mrf.mxu0
  %v1432 = vadd.f32 %v1322, %v1431
  %1433 = vmatmul.bf16.gmra.mxu0 %v1274
  %v1434 = vpop.f32.mrf.mxu0
  %v1435 = vadd.f32 %v1322, %v1434
  %v1436 = vpop.f32.mrf.mxu0
  %v1437 = vadd.f32 %v1322, %v1436
  %1438 = vmatmul.bf16.gmra.mxu0 %v1276
  %v1439 = vpop.f32.mrf.mxu0
  %v1440 = vadd.f32 %v1322, %v1439
  %v1441 = vpop.f32.mrf.mxu0
  %v1442 = vadd.f32 %v1322, %v1441
  %1443 = vmatmul.bf16.gmra.mxu0 %v1278
  %v1444 = vpop.f32.mrf.mxu0
  %v1445 = vadd.f32 %v1322, %v1444
  %v1446 = vpop.f32.mrf.mxu0
  %v1447 = vadd.f32 %v1322, %v1446
  %1448 = vmatmul.bf16.gmra.mxu0 %v1280
  %v1449 = vpop.f32.mrf.mxu0
  %v1450 = vadd.f32 %v1322, %v1449
  %v1451 = vpop.f32.mrf.mxu0
  %v1452 = vadd.f32 %v1322, %v1451
  %1453 = vmatmul.bf16.gmra.mxu0 %v1282
  %v1454 = vpop.f32.mrf.mxu0
  %v1455 = vadd.f32 %v1322, %v1454
  %v1456 = vpop.f32.mrf.mxu0
  %v1457 = vadd.f32 %v1322, %v1456
  %1458 = vmatmul.bf16.gmra.mxu0 %v1284
  %v1459 = vpop.f32.mrf.mxu0
  %v1460 = vadd.f32 %v1322, %v1459
  %v1461 = vpop.f32.mrf.mxu0
  %v1462 = vadd.f32 %v1322, %v1461
  %1463 = vmatmul.bf16.gmra.mxu0 %v1286
  %v1464 = vpop.f32.mrf.mxu0
  %v1465 = vadd.f32 %v1322, %v1464
  %v1466 = vpop.f32.mrf.mxu0
  %v1467 = vadd.f32 %v1322, %v1466
  %1468 = vdwg.mxu0
  %1469 = vmatpush.bf16.msra.mxu0 %v1403
  %1470 = vmatpush.bf16.msra.mxu0 %v1402
  %1471 = vmatpush.bf16.msra.mxu0 %v1401
  %1472 = vmatpush.bf16.msra.mxu0 %v1400
  %1473 = vmatpush.bf16.msra.mxu0 %v1399
  %1474 = vmatpush.bf16.msra.mxu0 %v1398
  %1475 = vmatpush.bf16.msra.mxu0 %v1397
  %1476 = vmatpush.bf16.msra.mxu0 %v1396
  %1477 = vmatmul.bf16.gmra.mxu0 %v1273
  %v1478 = vpop.f32.mrf.mxu0
  %v1479 = vadd.f32 %v1430, %v1478
  %v1480 = vpop.f32.mrf.mxu0
  %v1481 = vadd.f32 %v1432, %v1480
  %1482 = vmatmul.bf16.gmra.mxu0 %v1275
  %v1483 = vpop.f32.mrf.mxu0
  %v1484 = vadd.f32 %v1435, %v1483
  %v1485 = vpop.f32.mrf.mxu0
  %v1486 = vadd.f32 %v1437, %v1485
  %1487 = vmatmul.bf16.gmra.mxu0 %v1277
  %v1488 = vpop.f32.mrf.mxu0
  %v1489 = vadd.f32 %v1440, %v1488
  %v1490 = vpop.f32.mrf.mxu0
  %v1491 = vadd.f32 %v1442, %v1490
  %1492 = vmatmul.bf16.gmra.mxu0 %v1279
  %v1493 = vpop.f32.mrf.mxu0
  %v1494 = vadd.f32 %v1445, %v1493
  %v1495 = vpop.f32.mrf.mxu0
  %v1496 = vadd.f32 %v1447, %v1495
  %1497 = vmatmul.bf16.gmra.mxu0 %v1281
  %v1498 = vpop.f32.mrf.mxu0
  %v1499 = vadd.f32 %v1450, %v1498
  %v1500 = vpop.f32.mrf.mxu0
  %v1501 = vadd.f32 %v1452, %v1500
  %1502 = vmatmul.bf16.gmra.mxu0 %v1283
  %v1503 = vpop.f32.mrf.mxu0
  %v1504 = vadd.f32 %v1455, %v1503
  %v1505 = vpop.f32.mrf.mxu0
  %v1506 = vadd.f32 %v1457, %v1505
  %1507 = vmatmul.bf16.gmra.mxu0 %v1285
  %v1508 = vpop.f32.mrf.mxu0
  %v1509 = vadd.f32 %v1460, %v1508
  %v1510 = vpop.f32.mrf.mxu0
  %v1511 = vadd.f32 %v1462, %v1510
  %1512 = vmatmul.bf16.gmra.mxu0 %v1287
  %v1513 = vpop.f32.mrf.mxu0
  %v1514 = vadd.f32 %v1465, %v1513
  %v1515 = vpop.f32.mrf.mxu0
  %v1516 = vadd.f32 %v1467, %v1515
  %1517 = vdwg.mxu0
  %1518 = vst [vmem:[%s7] sm:$0xff] %v1479
  %1519 = vst [vmem:[%s7 + $0x8] sm:$0xff] %v1481
  %1520 = vst [vmem:[%s7 + $0x10] sm:$0xff] %v1484
  %1521 = vst [vmem:[%s7 + $0x18] sm:$0xff] %v1486
  %1522 = vst [vmem:[%s7 + $0x20] sm:$0xff] %v1489
  %1523 = vst [vmem:[%s7 + $0x28] sm:$0xff] %v1491
  %1524 = vst [vmem:[%s7 + $0x30] sm:$0xff] %v1494
  %1525 = vst [vmem:[%s7 + $0x38] sm:$0xff] %v1496
  %1526 = vst [vmem:[%s7 + $0x40] sm:$0xff] %v1499
  %1527 = vst [vmem:[%s7 + $0x48] sm:$0xff] %v1501
  %1528 = vst [vmem:[%s7 + $0x50] sm:$0xff] %v1504
  %1529 = vst [vmem:[%s7 + $0x58] sm:$0xff] %v1506
  %1530 = vst [vmem:[%s7 + $0x60] sm:$0xff] %v1509
  %1531 = vst [vmem:[%s7 + $0x68] sm:$0xff] %v1511
  %1532 = vst [vmem:[%s7 + $0x70] sm:$0xff] %v1514
  %1533 = vst [vmem:[%s7 + $0x78] sm:$0xff] %v1516
  // Predicated region
  $region30: #{stock_predictor_forward.1} parent=0 // pred_check
    _
  $region31: #{stock_predictor_forward.1} parent=0 // pred_check_branch
    %1535 = sbr.rel (0) target = $region33
  $region32: #{stock_predictor_forward.1} parent=0 // pred_region
    _
  $region33: #{stock_predictor_forward.1} parent=0 // pred_fallthru
    _
  // Predicated region
  $region34: #{stock_predictor_forward.1} parent=0 // pred_check
    _
  $region35: #{stock_predictor_forward.1} parent=0 // pred_check_branch
    %1537 = sbr.rel (0) target = $region37
  $region36: #{stock_predictor_forward.1} parent=0 // pred_region
    _
  $region37: #{stock_predictor_forward.1} parent=0 // pred_fallthru
    _

</llo_original>
